<compile_context>
chip_gen: v7x
topology: tpu7x:2x2x1
jax: 0.10.0
libtpu: 0.0.40
codegen_flags: <defaults>
</compile_context>

<pallas_src>
import functools
import math

import jax
import jax.numpy as jnp
from jax import lax
from jax.experimental import pallas as pl
from jax.experimental.pallas import tpu as pltpu

_LANE = 128
_INV_SQRT2 = 1.0 / math.sqrt(2.0)


# --------------------------------------------------------------------------
# tiling helpers
# --------------------------------------------------------------------------
def _sublane(itemsize: int) -> int:
    # dense sublane packing: f32 -> 8, bf16 -> 16, int8/fp8 -> 32
    return {4: 8, 2: 16, 1: 32}.get(itemsize, 8)


def _round_up(x: int, m: int) -> int:
    return ((x + m - 1) // m) * m


def _choose_tiles(rows, H, V, x_it, w1_it, wd_it, out_it, *, budget_bytes=40 << 20):
    """Pick (tm, tn) from an explicit VMEM byte budget.

    Budget targets v7x (64 MiB physical VMEM per TensorCore); the same tiles are
    comfortably legal on v5e/v6e (128 MiB physical).
    """
    sub = _sublane(x_it)

    # Vocab tile: lane-dense multiple of 128, ~8 MiB of w_dec per block, <= 4096.
    tn_cap = max(_LANE, ((8 << 20) // max(1, H * wd_it)) // _LANE * _LANE)
    tn_cap = min(tn_cap, 4096)
    tn = V if V <= tn_cap else tn_cap          # full-dim block is always legal

    # Row tile from the remaining budget.
    #   resident : W1 (1 buf) + b1/gamma/beta (negligible)
    #   streamed : w_dec tile (2 bufs)
    #   per row  : x tile (2 bufs) + h scratch (1 buf) + out tile (2 bufs)
    fixed = H * H * w1_it + 2 * H * tn * wd_it + 4 * H * max(x_it, w1_it)
    per_row = 3 * H * x_it + 2 * tn * out_it
    avail = max(budget_bytes - fixed, sub * per_row)
    tm_cap = max(sub, min((avail // per_row) // sub * sub, 1024))
    if rows <= tm_cap:
        tm = rows                               # full-dim block is always legal
    else:
        n_tiles = pl.cdiv(rows, tm_cap)         # balance the tail tile
        tm = _round_up(pl.cdiv(rows, n_tiles), sub)
    return tm, tn


# --------------------------------------------------------------------------
# fused kernel: dense(H->H) + exact-erf GELU + LayerNorm + decoder matmul
# --------------------------------------------------------------------------
def _mlm_head_kernel(x_ref, w1_ref, b1_ref, g_ref, beta_ref, wd_ref, o_ref,
                     h_ref, *, eps):
    # Transform once per row tile; result stays resident in VMEM scratch.
    @pl.when(pl.program_id(1) == 0)
    def _():
        # MXU operands in native dtype; f32 accumulation.
        y = jnp.dot(x_ref[...], w1_ref[...], preferred_element_type=jnp.float32)
        y = y + b1_ref[...].astype(jnp.float32)
        # exact GELU: x * 0.5 * (1 + erf(x / sqrt(2)))  (torch F.gelu default)
        y = y * 0.5 * (1.0 + lax.erf(y * _INV_SQRT2))
        # LayerNorm over hidden axis; biased variance, var = E[y^2] - mean^2
        mean = jnp.mean(y, axis=-1, keepdims=True)
        var = jnp.mean(y * y, axis=-1, keepdims=True) - mean * mean
        y = (y - mean) * lax.rsqrt(var + eps)
        y = y * g_ref[...].astype(jnp.float32) + beta_ref[...].astype(jnp.float32)
        h_ref[...] = y.astype(h_ref.dtype)

    # Decoder matmul against the streamed (H, tn) vocab tile (no bias in forward).
    o_ref[...] = jnp.dot(h_ref[...], wd_ref[...],
                         preferred_element_type=jnp.float32).astype(o_ref.dtype)


# --------------------------------------------------------------------------
# Full BertForMaskedLM forward
# --------------------------------------------------------------------------
def bert_mlm_forward(hidden_states, embeddings, params, *, eps=1e-12):
    """prediction_scores = decoder(LayerNorm(GELU(dense(hidden_states))))."""
    del embeddings  # accepted but unused, exactly like BertLMPredictionHead.forward
    orig_shape = hidden_states.shape
    H = orig_shape[-1]
    w1 = params["w1"]
    b1 = params["b1"].reshape(1, H)
    gamma = params["gamma"].reshape(1, H)
    beta = params["beta"].reshape(1, H)
    w_dec = params["w_dec"]
    V = w_dec.shape[1]

    x2d = hidden_states.reshape(-1, H)
    rows = x2d.shape[0]
    out_dtype = x2d.dtype

    x_it = jnp.dtype(x2d.dtype).itemsize
    w1_it = jnp.dtype(w1.dtype).itemsize
    wd_it = jnp.dtype(w_dec.dtype).itemsize
    out_it = jnp.dtype(out_dtype).itemsize

    tm, tn = _choose_tiles(rows, H, V, x_it, w1_it, wd_it, out_it)
    grid = (pl.cdiv(rows, tm), pl.cdiv(V, tn))

    # Explicit VMEM limit: raises v5e's 16 MiB scoped default, stays <= 56 MiB so
    # it is always legal on v7x's 64 MiB physical VMEM.
    est = (2 * tm * H * x_it            # x tile, double-buffered
           + H * H * w1_it              # W1 (single-buffered)
           + 4 * H * max(x_it, w1_it)   # b1 / gamma / beta
           + 2 * H * tn * wd_it         # w_dec tile, double-buffered
           + 2 * tm * tn * out_it       # out tile, double-buffered
           + tm * H * x_it)             # h scratch
    vmem_limit = int(min(max(est + (4 << 20), 24 << 20), 56 << 20))

    kernel = functools.partial(_mlm_head_kernel, eps=eps)

    def _call(single_buffer_consts: bool):
        const_kw = {"pipeline_mode": pl.Buffered(1)} if single_buffer_consts else {}
        const = lambda shape: pl.BlockSpec(shape, lambda i, j: (0, 0), **const_kw)
        return pl.pallas_call(
            kernel,
            out_shape=jax.ShapeDtypeStruct((rows, V), out_dtype),
            grid_spec=pltpu.PrefetchScalarGridSpec(
                num_scalar_prefetch=0,
                grid=grid,
                in_specs=[
                    pl.BlockSpec((tm, H), lambda i, j: (i, 0)),   # x row tile (reused across j)
                    const((H, H)),                                # W1 (resident)
                    const((1, H)),                                # b1
                    const((1, H)),                                # LN gamma
                    const((1, H)),                                # LN beta
                    pl.BlockSpec((H, tn), lambda i, j: (0, j)),   # w_dec vocab tile (streamed)
                ],
                out_specs=pl.BlockSpec((tm, tn), lambda i, j: (i, j)),
                scratch_shapes=[pltpu.VMEM((tm, H), x2d.dtype)],  # h never hits HBM
            ),
            compiler_params=pltpu.CompilerParams(
                dimension_semantics=("parallel", "arbitrary"),
                vmem_limit_bytes=vmem_limit,
            ),
        )(x2d, w1, b1, gamma, beta, w_dec)

    try:
        scores2d = _call(True)
    except Exception:
        # TODO(synk): pipeline_mode=pl.Buffered(1) unsupported on this jax build;
        # fall back to default double-buffering of the resident blocks.
        scores2d = _call(False)

    return scores2d.reshape(*orig_shape[:-1], V)


# --------------------------------------------------------------------------
# Pure-JAX reference
# --------------------------------------------------------------------------
def _reference(hidden_states, embeddings, params, *, eps=1e-12):
    del embeddings
    x = hidden_states.astype(jnp.float32)
    y = x @ params["w1"].astype(jnp.float32) + params["b1"].astype(jnp.float32)
    y = y * 0.5 * (1.0 + lax.erf(y / math.sqrt(2.0)))
    mean = y.mean(-1, keepdims=True)
    var = ((y - mean) ** 2).mean(-1, keepdims=True)
    y = (y - mean) / jnp.sqrt(var + eps)
    y = y * params["gamma"].astype(jnp.float32) + params["beta"].astype(jnp.float32)
    out = y @ params["w_dec"].astype(jnp.float32)
    return out.astype(hidden_states.dtype)


if __name__ == "__main__":
    key = jax.random.PRNGKey(0)
    B, S, H, V = 2, 8, 128, 512
    eps = 1e-12

    ks = jax.random.split(key, 7)
    x = jax.random.normal(ks[0], (B, S, H), dtype=jnp.float32)
    # `embeddings` is part of the PyTorch forward signature but unused there.
    embeddings = jax.random.normal(ks[1], (V, H), dtype=jnp.float32)

    params = {
        "w1": jax.random.normal(ks[2], (H, H), jnp.float32) / math.sqrt(H),
        "b1": 0.1 * jax.random.normal(ks[3], (H,), jnp.float32),
        "gamma": 1.0 + 0.1 * jax.random.normal(ks[4], (H,), jnp.float32),
        "beta": 0.1 * jax.random.normal(ks[5], (H,), jnp.float32),
        "w_dec": jax.random.normal(ks[6], (H, V), jnp.float32) / math.sqrt(H),
        # NOTE: the PyTorch module also defines a vocab-sized `bias` parameter,
        # but forward never adds it (decoder has bias=False), so it is omitted.
    }

    out = bert_mlm_forward(x, embeddings, params, eps=eps)
    out = jax.block_until_ready(out)

    ref = _reference(x, embeddings, params, eps=eps)
    assert out.shape == (B, S, V), out.shape
    assert out.dtype == x.dtype
    assert jnp.allclose(out, ref, atol=2e-2, rtol=2e-2), "mismatch vs reference"

    print("KERNEL_OK")
</pallas_src>

<mosaic_0001>
module attributes {stable_mosaic.version = 11 : i64} {
  func.func @_mlm_head_kernel(%arg0: i32, %arg1: i32, %arg2: memref<16x128xf32, #tpu.memory_space<vmem>>, %arg3: memref<128x128xf32, #tpu.memory_space<vmem>>, %arg4: memref<1x128xf32, #tpu.memory_space<vmem>>, %arg5: memref<1x128xf32, #tpu.memory_space<vmem>>, %arg6: memref<1x128xf32, #tpu.memory_space<vmem>>, %arg7: memref<128x512xf32, #tpu.memory_space<vmem>>, %arg8: memref<16x512xf32, #tpu.memory_space<vmem>>, %arg9: memref<16x128xf32, #tpu.memory_space<vmem>>) attributes {dimension_semantics = [#tpu.dimension_semantics<parallel>, #tpu.dimension_semantics<arbitrary>], iteration_bounds = array<i64: 1, 1>, scalar_prefetch = 0 : i64, scratch_operands = 1 : i64, tpu.core_type = #tpu.core_type<tc>, window_params = [{transform_indices = @transform_0, window_bounds = array<i64: 16, 128>}, {pipeline_mode = #tpu.pipeline_mode<synchronous>, transform_indices = @transform_1, window_bounds = array<i64: 128, 128>}, {pipeline_mode = #tpu.pipeline_mode<synchronous>, transform_indices = @transform_2, window_bounds = array<i64: 1, 128>}, {pipeline_mode = #tpu.pipeline_mode<synchronous>, transform_indices = @transform_3, window_bounds = array<i64: 1, 128>}, {pipeline_mode = #tpu.pipeline_mode<synchronous>, transform_indices = @transform_4, window_bounds = array<i64: 1, 128>}, {transform_indices = @transform_5, window_bounds = array<i64: 128, 512>}, {transform_indices = @transform_6, window_bounds = array<i64: 16, 512>}]} {
    %c0_i32 = arith.constant 0 : i32
    %0 = arith.cmpi eq, %arg1, %c0_i32 : i32
    %1 = arith.extui %0 : i1 to i32
    %c0_i32_0 = arith.constant 0 : i32
    %2 = arith.cmpi ne, %1, %c0_i32_0 : i32
    scf.if %2 {
      %c0_6 = arith.constant 0 : index
      %c0_7 = arith.constant 0 : index
      %7 = vector.load %arg2[%c0_6, %c0_7] : memref<16x128xf32, #tpu.memory_space<vmem>>, vector<16x128xf32>
      %c0_8 = arith.constant 0 : index
      %c0_9 = arith.constant 0 : index
      %8 = vector.load %arg3[%c0_8, %c0_9] : memref<128x128xf32, #tpu.memory_space<vmem>>, vector<128x128xf32>
      %cst_10 = arith.constant dense<0.000000e+00> : vector<16x128xf32>
      %9 = tpu.matmul %7, %8, %cst_10 {dimension_numbers = #tpu.dot_dimension_numbers<[1], [0], [0], [1], [0, 0, 1, 1], [], []>} : vector<16x128xf32>, vector<128x128xf32>, vector<16x128xf32> -> vector<16x128xf32>
      %c0_11 = arith.constant 0 : index
      %c0_12 = arith.constant 0 : index
      %10 = vector.load %arg4[%c0_11, %c0_12] : memref<1x128xf32, #tpu.memory_space<vmem>>, vector<1x128xf32>
      %11 = vector.broadcast %10 : vector<1x128xf32> to vector<16x128xf32>
      %12 = arith.addf %9, %11 : vector<16x128xf32>
      %cst_13 = arith.constant 5.000000e-01 : f32
      %13 = vector.broadcast %cst_13 : f32 to vector<16x128xf32>
      %14 = arith.mulf %12, %13 : vector<16x128xf32>
      %cst_14 = arith.constant 0.707106769 : f32
      %15 = vector.broadcast %cst_14 : f32 to vector<16x128xf32>
      %16 = arith.mulf %12, %15 : vector<16x128xf32>
      %17 = math.erf %16 : vector<16x128xf32>
      %cst_15 = arith.constant 1.000000e+00 : f32
      %18 = vector.broadcast %cst_15 : f32 to vector<16x128xf32>
      %19 = arith.addf %18, %17 : vector<16x128xf32>
      %20 = arith.mulf %14, %19 : vector<16x128xf32>
      %cst_16 = arith.constant dense<0.000000e+00> : vector<16xf32>
      %21 = vector.multi_reduction <add>, %20, %cst_16 [1] : vector<16x128xf32> to vector<16xf32>
      %22 = vector.shape_cast %21 : vector<16xf32> to vector<16x1xf32>
      %cst_17 = arith.constant 1.280000e+02 : f32
      %23 = vector.broadcast %cst_17 : f32 to vector<16x1xf32>
      %24 = arith.divf %22, %23 : vector<16x1xf32>
      %25 = arith.mulf %20, %20 : vector<16x128xf32>
      %cst_18 = arith.constant dense<0.000000e+00> : vector<16xf32>
      %26 = vector.multi_reduction <add>, %25, %cst_18 [1] : vector<16x128xf32> to vector<16xf32>
      %27 = vector.shape_cast %26 : vector<16xf32> to vector<16x1xf32>
      %cst_19 = arith.constant 1.280000e+02 : f32
      %28 = vector.broadcast %cst_19 : f32 to vector<16x1xf32>
      %29 = arith.divf %27, %28 : vector<16x1xf32>
      %30 = arith.mulf %24, %24 : vector<16x1xf32>
      %31 = arith.subf %29, %30 : vector<16x1xf32>
      %32 = vector.broadcast %24 : vector<16x1xf32> to vector<16x128xf32>
      %33 = arith.subf %20, %32 : vector<16x128xf32>
      %cst_20 = arith.constant 9.99999996E-13 : f32
      %34 = vector.broadcast %cst_20 : f32 to vector<16x1xf32>
      %35 = arith.addf %31, %34 : vector<16x1xf32>
      %36 = math.rsqrt %35 : vector<16x1xf32>
      %37 = vector.broadcast %36 : vector<16x1xf32> to vector<16x128xf32>
      %38 = arith.mulf %33, %37 : vector<16x128xf32>
      %c0_21 = arith.constant 0 : index
      %c0_22 = arith.constant 0 : index
      %39 = vector.load %arg5[%c0_21, %c0_22] : memref<1x128xf32, #tpu.memory_space<vmem>>, vector<1x128xf32>
      %40 = vector.broadcast %39 : vector<1x128xf32> to vector<16x128xf32>
      %41 = arith.mulf %38, %40 : vector<16x128xf32>
      %c0_23 = arith.constant 0 : index
      %c0_24 = arith.constant 0 : index
      %42 = vector.load %arg6[%c0_23, %c0_24] : memref<1x128xf32, #tpu.memory_space<vmem>>, vector<1x128xf32>
      %43 = vector.broadcast %42 : vector<1x128xf32> to vector<16x128xf32>
      %44 = arith.addf %41, %43 : vector<16x128xf32>
      %c0_25 = arith.constant 0 : index
      %c0_26 = arith.constant 0 : index
      %45 = vector.load %arg9[%c0_25, %c0_26] : memref<16x128xf32, #tpu.memory_space<vmem>>, vector<16x128xf32>
      tpu.vector_store %arg9[%c0_25, %c0_26], %44 {strides = array<i32>} : memref<16x128xf32, #tpu.memory_space<vmem>>, vector<16x128xf32>,
    } else {
    }
    %c0 = arith.constant 0 : index
    %c0_1 = arith.constant 0 : index
    %3 = vector.load %arg9[%c0, %c0_1] : memref<16x128xf32, #tpu.memory_space<vmem>>, vector<16x128xf32>
    %c0_2 = arith.constant 0 : index
    %c0_3 = arith.constant 0 : index
    %4 = vector.load %arg7[%c0_2, %c0_3] : memref<128x512xf32, #tpu.memory_space<vmem>>, vector<128x512xf32>
    %cst = arith.constant dense<0.000000e+00> : vector<16x512xf32>
    %5 = tpu.matmul %3, %4, %cst {dimension_numbers = #tpu.dot_dimension_numbers<[1], [0], [0], [1], [0, 0, 1, 1], [], []>} : vector<16x128xf32>, vector<128x512xf32>, vector<16x512xf32> -> vector<16x512xf32>
    %c0_4 = arith.constant 0 : index
    %c0_5 = arith.constant 0 : index
    %6 = vector.load %arg8[%c0_4, %c0_5] : memref<16x512xf32, #tpu.memory_space<vmem>>, vector<16x512xf32>
    tpu.vector_store %arg8[%c0_4, %c0_5], %5 {strides = array<i32>} : memref<16x512xf32, #tpu.memory_space<vmem>>, vector<16x512xf32>,
    return
  }
  func.func @transform_0(%arg0: i32, %arg1: i32) -> (i32, i32) {
    %c0_i32 = arith.constant 0 : i32
    %c0_i32_0 = arith.constant 0 : i32
    return %arg0, %c0_i32 : i32, i32
  }
  func.func @transform_1(%arg0: i32, %arg1: i32) -> (i32, i32) {
    %c0_i32 = arith.constant 0 : i32
    %c0_i32_0 = arith.constant 0 : i32
    %c0_i32_1 = arith.constant 0 : i32
    return %c0_i32, %c0_i32_0 : i32, i32
  }
  func.func @transform_2(%arg0: i32, %arg1: i32) -> (i32, i32) {
    %c0_i32 = arith.constant 0 : i32
    %c0_i32_0 = arith.constant 0 : i32
    %c0_i32_1 = arith.constant 0 : i32
    return %c0_i32, %c0_i32_0 : i32, i32
  }
  func.func @transform_3(%arg0: i32, %arg1: i32) -> (i32, i32) {
    %c0_i32 = arith.constant 0 : i32
    %c0_i32_0 = arith.constant 0 : i32
    %c0_i32_1 = arith.constant 0 : i32
    return %c0_i32, %c0_i32_0 : i32, i32
  }
  func.func @transform_4(%arg0: i32, %arg1: i32) -> (i32, i32) {
    %c0_i32 = arith.constant 0 : i32
    %c0_i32_0 = arith.constant 0 : i32
    %c0_i32_1 = arith.constant 0 : i32
    return %c0_i32, %c0_i32_0 : i32, i32
  }
  func.func @transform_5(%arg0: i32, %arg1: i32) -> (i32, i32) {
    %c0_i32 = arith.constant 0 : i32
    %c0_i32_0 = arith.constant 0 : i32
    return %c0_i32, %arg1 : i32, i32
  }
  func.func @transform_6(%arg0: i32, %arg1: i32) -> (i32, i32) {
    %c0_i32 = arith.constant 0 : i32
    return %arg0, %arg1 : i32, i32
  }
}

module attributes {stable_mosaic.version = 11 : i64} {
  func.func @_mlm_head_kernel(%arg0: i32, %arg1: i32, %arg2: memref<16x128xf32, #tpu.memory_space<vmem>>, %arg3: memref<128x128xf32, #tpu.memory_space<vmem>>, %arg4: memref<1x128xf32, #tpu.memory_space<vmem>>, %arg5: memref<1x128xf32, #tpu.memory_space<vmem>>, %arg6: memref<1x128xf32, #tpu.memory_space<vmem>>, %arg7: memref<128x512xf32, #tpu.memory_space<vmem>>, %arg8: memref<16x512xf32, #tpu.memory_space<vmem>>, %arg9: memref<16x128xf32, #tpu.memory_space<vmem>>) attributes {dimension_semantics = [#tpu.dimension_semantics<parallel>, #tpu.dimension_semantics<arbitrary>], iteration_bounds = array<i64: 1, 1>, scalar_prefetch = 0 : i64, scratch_operands = 1 : i64, tpu.core_type = #tpu.core_type<tc>, window_params = [{transform_indices = @transform_0, window_bounds = array<i64: 16, 128>}, {pipeline_mode = #tpu.pipeline_mode<synchronous>, transform_indices = @transform_1, window_bounds = array<i64: 128, 128>}, {pipeline_mode = #tpu.pipeline_mode<synchronous>, transform_indices = @transform_2, window_bounds = array<i64: 1, 128>}, {pipeline_mode = #tpu.pipeline_mode<synchronous>, transform_indices = @transform_3, window_bounds = array<i64: 1, 128>}, {pipeline_mode = #tpu.pipeline_mode<synchronous>, transform_indices = @transform_4, window_bounds = array<i64: 1, 128>}, {transform_indices = @transform_5, window_bounds = array<i64: 128, 512>}, {transform_indices = @transform_6, window_bounds = array<i64: 16, 512>}]} {
    %c0_i32 = arith.constant 0 : i32
    %0 = arith.cmpi eq, %arg1, %c0_i32 : i32
    %1 = arith.extui %0 : i1 to i32
    %c0_i32_0 = arith.constant 0 : i32
    %2 = arith.cmpi ne, %1, %c0_i32_0 : i32
    scf.if %2 {
      %c0_6 = arith.constant 0 : index
      %c0_7 = arith.constant 0 : index
      %7 = vector.load %arg2[%c0_6, %c0_7] : memref<16x128xf32, #tpu.memory_space<vmem>>, vector<16x128xf32>
      %c0_8 = arith.constant 0 : index
      %c0_9 = arith.constant 0 : index
      %8 = vector.load %arg3[%c0_8, %c0_9] : memref<128x128xf32, #tpu.memory_space<vmem>>, vector<128x128xf32>
      %cst_10 = arith.constant dense<0.000000e+00> : vector<16x128xf32>
      %9 = tpu.matmul %7, %8, %cst_10 {dimension_numbers = #tpu.dot_dimension_numbers<[1], [0], [0], [1], [0, 0, 1, 1], [], []>} : vector<16x128xf32>, vector<128x128xf32>, vector<16x128xf32> -> vector<16x128xf32>
      %c0_11 = arith.constant 0 : index
      %c0_12 = arith.constant 0 : index
      %10 = vector.load %arg4[%c0_11, %c0_12] : memref<1x128xf32, #tpu.memory_space<vmem>>, vector<1x128xf32>
      %11 = vector.broadcast %10 : vector<1x128xf32> to vector<16x128xf32>
      %12 = arith.addf %9, %11 : vector<16x128xf32>
      %cst_13 = arith.constant 5.000000e-01 : f32
      %13 = vector.broadcast %cst_13 : f32 to vector<16x128xf32>
      %14 = arith.mulf %12, %13 : vector<16x128xf32>
      %cst_14 = arith.constant 0.707106769 : f32
      %15 = vector.broadcast %cst_14 : f32 to vector<16x128xf32>
      %16 = arith.mulf %12, %15 : vector<16x128xf32>
      %17 = math.erf %16 : vector<16x128xf32>
      %cst_15 = arith.constant 1.000000e+00 : f32
      %18 = vector.broadcast %cst_15 : f32 to vector<16x128xf32>
      %19 = arith.addf %18, %17 : vector<16x128xf32>
      %20 = arith.mulf %14, %19 : vector<16x128xf32>
      %cst_16 = arith.constant dense<0.000000e+00> : vector<16xf32>
      %21 = vector.multi_reduction <add>, %20, %cst_16 [1] : vector<16x128xf32> to vector<16xf32>
      %22 = vector.shape_cast %21 : vector<16xf32> to vector<16x1xf32>
      %cst_17 = arith.constant 1.280000e+02 : f32
      %23 = vector.broadcast %cst_17 : f32 to vector<16x1xf32>
      %24 = arith.divf %22, %23 : vector<16x1xf32>
      %25 = arith.mulf %20, %20 : vector<16x128xf32>
      %cst_18 = arith.constant dense<0.000000e+00> : vector<16xf32>
      %26 = vector.multi_reduction <add>, %25, %cst_18 [1] : vector<16x128xf32> to vector<16xf32>
      %27 = vector.shape_cast %26 : vector<16xf32> to vector<16x1xf32>
      %cst_19 = arith.constant 1.280000e+02 : f32
      %28 = vector.broadcast %cst_19 : f32 to vector<16x1xf32>
      %29 = arith.divf %27, %28 : vector<16x1xf32>
      %30 = arith.mulf %24, %24 : vector<16x1xf32>
      %31 = arith.subf %29, %30 : vector<16x1xf32>
      %32 = vector.broadcast %24 : vector<16x1xf32> to vector<16x128xf32>
      %33 = arith.subf %20, %32 : vector<16x128xf32>
      %cst_20 = arith.constant 9.99999996E-13 : f32
      %34 = vector.broadcast %cst_20 : f32 to vector<16x1xf32>
      %35 = arith.addf %31, %34 : vector<16x1xf32>
      %36 = math.rsqrt %35 : vector<16x1xf32>
      %37 = vector.broadcast %36 : vector<16x1xf32> to vector<16x128xf32>
      %38 = arith.mulf %33, %37 : vector<16x128xf32>
      %c0_21 = arith.constant 0 : index
      %c0_22 = arith.constant 0 : index
      %39 = vector.load %arg5[%c0_21, %c0_22] : memref<1x128xf32, #tpu.memory_space<vmem>>, vector<1x128xf32>
      %40 = vector.broadcast %39 : vector<1x128xf32> to vector<16x128xf32>
      %41 = arith.mulf %38, %40 : vector<16x128xf32>
      %c0_23 = arith.constant 0 : index
      %c0_24 = arith.constant 0 : index
      %42 = vector.load %arg6[%c0_23, %c0_24] : memref<1x128xf32, #tpu.memory_space<vmem>>, vector<1x128xf32>
      %43 = vector.broadcast %42 : vector<1x128xf32> to vector<16x128xf32>
      %44 = arith.addf %41, %43 : vector<16x128xf32>
      %c0_25 = arith.constant 0 : index
      %c0_26 = arith.constant 0 : index
      %45 = vector.load %arg9[%c0_25, %c0_26] : memref<16x128xf32, #tpu.memory_space<vmem>>, vector<16x128xf32>
      tpu.vector_store %arg9[%c0_25, %c0_26], %44 {strides = array<i32>} : memref<16x128xf32, #tpu.memory_space<vmem>>, vector<16x128xf32>,
    } else {
    }
    %c0 = arith.constant 0 : index
    %c0_1 = arith.constant 0 : index
    %3 = vector.load %arg9[%c0, %c0_1] : memref<16x128xf32, #tpu.memory_space<vmem>>, vector<16x128xf32>
    %c0_2 = arith.constant 0 : index
    %c0_3 = arith.constant 0 : index
    %4 = vector.load %arg7[%c0_2, %c0_3] : memref<128x512xf32, #tpu.memory_space<vmem>>, vector<128x512xf32>
    %cst = arith.constant dense<0.000000e+00> : vector<16x512xf32>
    %5 = tpu.matmul %3, %4, %cst {dimension_numbers = #tpu.dot_dimension_numbers<[1], [0], [0], [1], [0, 0, 1, 1], [], []>} : vector<16x128xf32>, vector<128x512xf32>, vector<16x512xf32> -> vector<16x512xf32>
    %c0_4 = arith.constant 0 : index
    %c0_5 = arith.constant 0 : index
    %6 = vector.load %arg8[%c0_4, %c0_5] : memref<16x512xf32, #tpu.memory_space<vmem>>, vector<16x512xf32>
    tpu.vector_store %arg8[%c0_4, %c0_5], %5 {strides = array<i32>} : memref<16x512xf32, #tpu.memory_space<vmem>>, vector<16x512xf32>,
    return
  }
  func.func @transform_0(%arg0: i32, %arg1: i32) -> (i32, i32) {
    %c0_i32 = arith.constant 0 : i32
    %c0_i32_0 = arith.constant 0 : i32
    return %arg0, %c0_i32 : i32, i32
  }
  func.func @transform_1(%arg0: i32, %arg1: i32) -> (i32, i32) {
    %c0_i32 = arith.constant 0 : i32
    %c0_i32_0 = arith.constant 0 : i32
    %c0_i32_1 = arith.constant 0 : i32
    return %c0_i32, %c0_i32_0 : i32, i32
  }
  func.func @transform_2(%arg0: i32, %arg1: i32) -> (i32, i32) {
    %c0_i32 = arith.constant 0 : i32
    %c0_i32_0 = arith.constant 0 : i32
    %c0_i32_1 = arith.constant 0 : i32
    return %c0_i32, %c0_i32_0 : i32, i32
  }
  func.func @transform_3(%arg0: i32, %arg1: i32) -> (i32, i32) {
    %c0_i32 = arith.constant 0 : i32
    %c0_i32_0 = arith.constant 0 : i32
    %c0_i32_1 = arith.constant 0 : i32
    return %c0_i32, %c0_i32_0 : i32, i32
  }
  func.func @transform_4(%arg0: i32, %arg1: i32) -> (i32, i32) {
    %c0_i32 = arith.constant 0 : i32
    %c0_i32_0 = arith.constant 0 : i32
    %c0_i32_1 = arith.constant 0 : i32
    return %c0_i32, %c0_i32_0 : i32, i32
  }
  func.func @transform_5(%arg0: i32, %arg1: i32) -> (i32, i32) {
    %c0_i32 = arith.constant 0 : i32
    %c0_i32_0 = arith.constant 0 : i32
    return %c0_i32, %arg1 : i32, i32
  }
  func.func @transform_6(%arg0: i32, %arg1: i32) -> (i32, i32) {
    %c0_i32 = arith.constant 0 : i32
    return %arg0, %arg1 : i32, i32
  }
}

</mosaic_0001>

<llo_original>
// kernel: tpu_custom_call.1
$region0: #{tpu_custom_call.1}
  #allocation0 [shape = 'u32[]', space=smem, size = 0x4, offset = 0x4, fixed_abs, tag = 'smem constant byte address 0x4 - core index']
  #allocation1 [shape = 'u32[144,128]{1,0:T(1,128)}', space=vmem, size = 0x12000, scoped, tag = 'internal scratch']
  #allocation2 [shape = 'f32[16,128]{1,0:T(8,128)}', space=vmem, size = 0x2000, scoped, tag = 'scratch operand']
  %s0 = inlined_call_operand.hbm [shape: f32[16,128], index: 0, kind: input, shape index: {}]
  %s1 = inlined_call_operand.hbm [shape: f32[128,128], index: 1, kind: input, shape index: {}]
  %s2 = inlined_call_operand.vmem [shape: f32[1,128], index: 2, kind: input, shape index: {}]
  %s3 = inlined_call_operand.vmem [shape: f32[1,128], index: 3, kind: input, shape index: {}]
  %s4 = inlined_call_operand.vmem [shape: f32[1,128], index: 4, kind: input, shape index: {}]
  %s5 = inlined_call_operand.hbm [shape: f32[128,512], index: 5, kind: input, shape index: {}]
  %s6 = inlined_call_operand.hbm [shape: f32[16,512], index: 6, kind: output, shape index: {}]
  %s7 = sld [smem:[#allocation0]]
  $region50: #{tpu_custom_call.1} parent=0
    _
  %s9 = ssub.s32 1, %s7
  %s10 = scalar_select 0, %s9, %s7
  $region1: #{tpu_custom_call.1} parent=0
    #allocation3 [shape = 'u8[8192]{0}', space=vmem, size = 0x2000, scoped, tag = 'input window, operand 0, single buffered']
    #allocation4 [shape = 's32[1]{0}', space=sflag, size = 0x4, scoped, tag = 'scoped memory for tpu_custom_call.1']
    #allocation5 [shape = 's32[1]{0}', space=sflag, size = 0x4, scoped, tag = 'scoped memory for tpu_custom_call.1']
    #allocation6 [shape = 'u8[65536]{0}', space=vmem, size = 0x10000, scoped, tag = 'input window, operand 1, single buffered']
    #allocation7 [shape = 's32[1]{0}', space=sflag, size = 0x4, scoped, tag = 'scoped memory for tpu_custom_call.1']
    #allocation8 [shape = 'u8[262144]{0}', space=vmem, size = 0x40000, scoped, tag = 'input window, operand 5, single buffered']
    #allocation9 [shape = 'u8[32768]{0}', space=vmem, size = 0x8000, scoped, tag = 'output window, operand 0, single buffered']
    %11 = vsyncpa [#allocation4], 0
    %12 = vsyncpa [#allocation7], 0
    %13 = vsyncpa [#allocation5], 0
    // Predicated region
    $region2: #{tpu_custom_call.1} parent=1 // pred_check
      _
    $region3: #{tpu_custom_call.1} parent=1 // pred_check_branch
      %15 = sbr.rel (0) target = $region5
    $region4: #{tpu_custom_call.1} parent=1 // pred_region
      %s17 = ssub.s32 256, 256
      %18 = vsyncadd [#allocation4], %s17
      %s19 = sshll.u32 [#allocation3], 4
      %s20 = int_to_ptr.vmem [resolvable:$true] %s19
      %25 = dma.hbm_to_vmem [thread:$0]  %s0, 256, %s20, [#allocation4], 128, 128, 8
    $region5: #{tpu_custom_call.1} parent=1 // pred_fallthru
      _
    // Predicated region
    $region6: #{tpu_custom_call.1} parent=1 // pred_check
      _
    $region7: #{tpu_custom_call.1} parent=1 // pred_check_branch
      %27 = sbr.rel (0) target = $region9
    $region8: #{tpu_custom_call.1} parent=1 // pred_region
      %s29 = ssub.s32 2048, 2048
      %30 = vsyncadd [#allocation7], %s29
      %s31 = sshll.u32 [#allocation6], 4
      %s32 = int_to_ptr.vmem [resolvable:$true] %s31
      %37 = dma.hbm_to_vmem [thread:$0]  %s1, 2048, %s32, [#allocation7], 128, 128, 8
    $region9: #{tpu_custom_call.1} parent=1 // pred_fallthru
      _
    // Predicated region
    $region10: #{tpu_custom_call.1} parent=1 // pred_check
      _
    $region11: #{tpu_custom_call.1} parent=1 // pred_check_branch
      %39 = sbr.rel (0) target = $region13
    $region12: #{tpu_custom_call.1} parent=1 // pred_region
      _
    $region13: #{tpu_custom_call.1} parent=1 // pred_fallthru
      _
    // Predicated region
    $region14: #{tpu_custom_call.1} parent=1 // pred_check
      _
    $region15: #{tpu_custom_call.1} parent=1 // pred_check_branch
      %41 = sbr.rel (0) target = $region17
    $region16: #{tpu_custom_call.1} parent=1 // pred_region
      _
    $region17: #{tpu_custom_call.1} parent=1 // pred_fallthru
      _
    // Predicated region
    $region18: #{tpu_custom_call.1} parent=1 // pred_check
      _
    $region19: #{tpu_custom_call.1} parent=1 // pred_check_branch
      %43 = sbr.rel (0) target = $region21
    $region20: #{tpu_custom_call.1} parent=1 // pred_region
      _
    $region21: #{tpu_custom_call.1} parent=1 // pred_fallthru
      _
    // Predicated region
    $region22: #{tpu_custom_call.1} parent=1 // pred_check
      _
    $region23: #{tpu_custom_call.1} parent=1 // pred_check_branch
      %45 = sbr.rel (0) target = $region25
    $region24: #{tpu_custom_call.1} parent=1 // pred_region
      %s47 = ssub.s32 8192, 8192
      %48 = vsyncadd [#allocation7], %s47
      %s49 = sshll.u32 [#allocation8], 4
      %s50 = int_to_ptr.vmem [resolvable:$true] %s49
      %55 = dma.hbm_to_vmem [thread:$0]  %s5, 8192, %s50, [#allocation7], 512, 512, 32
    $region25: #{tpu_custom_call.1} parent=1 // pred_fallthru
      _
    // Predicated region
    $region26: #{tpu_custom_call.1} parent=1 // pred_check
      _
    $region27: #{tpu_custom_call.1} parent=1 // pred_check_branch
      %57 = sbr.rel (0) target = $region29
    $region28: #{tpu_custom_call.1} parent=1 // pred_region
      %58 = dma.done [#allocation4], 256
    $region29: #{tpu_custom_call.1} parent=1 // pred_fallthru
      _
    // Predicated region
    $region30: #{tpu_custom_call.1} parent=1 // pred_check
      _
    $region31: #{tpu_custom_call.1} parent=1 // pred_check_branch
      %60 = sbr.rel (0) target = $region33
    $region32: #{tpu_custom_call.1} parent=1 // pred_region
      %61 = dma.done [#allocation7], 2048
    $region33: #{tpu_custom_call.1} parent=1 // pred_fallthru
      _
    // Predicated region
    $region34: #{tpu_custom_call.1} parent=1 // pred_check
      _
    $region35: #{tpu_custom_call.1} parent=1 // pred_check_branch
      %63 = sbr.rel (0) target = $region37
    $region36: #{tpu_custom_call.1} parent=1 // pred_region
      %64 = dma.done [#allocation7], 8192
    $region37: #{tpu_custom_call.1} parent=1 // pred_fallthru
      _
    %p65 = scmp.eq.s32.totalorder 0, 0
    // Predicated region
    $region38: #{tpu_custom_call.1} parent=1 // pred_check
      %p66 = pneg %p65
    $region39: #{tpu_custom_call.1} parent=1 // pred_check_branch
      %68 = sbr.rel (%p66) target = $region41
    $region40: #{tpu_custom_call.1} parent=1 // pred_region
      %v69 = vld [vmem:[#allocation3] sm:$0xff]
      %v70 = vld [vmem:[#allocation3 + $0x8] sm:$0xff]
      %v71 = vld [vmem:[#allocation6] sm:$0xff]
      %v72 = vld [vmem:[#allocation6 + $0x8] sm:$0xff]
      %v73 = vld [vmem:[#allocation6 + $0x10] sm:$0xff]
      %v74 = vld [vmem:[#allocation6 + $0x18] sm:$0xff]
      %v75 = vld [vmem:[#allocation6 + $0x20] sm:$0xff]
      %v76 = vld [vmem:[#allocation6 + $0x28] sm:$0xff]
      %v77 = vld [vmem:[#allocation6 + $0x30] sm:$0xff]
      %v78 = vld [vmem:[#allocation6 + $0x38] sm:$0xff]
      %v79 = vld [vmem:[#allocation6 + $0x40] sm:$0xff]
      %v80 = vld [vmem:[#allocation6 + $0x48] sm:$0xff]
      %v81 = vld [vmem:[#allocation6 + $0x50] sm:$0xff]
      %v82 = vld [vmem:[#allocation6 + $0x58] sm:$0xff]
      %v83 = vld [vmem:[#allocation6 + $0x60] sm:$0xff]
      %v84 = vld [vmem:[#allocation6 + $0x68] sm:$0xff]
      %v85 = vld [vmem:[#allocation6 + $0x70] sm:$0xff]
      %v86 = vld [vmem:[#allocation6 + $0x78] sm:$0xff]
      %v87 = vld [vmem:[%s2] sm:$0x1]
      %v89 = vlaneseq
      %v90 = vshrl.u32 %v89, 7
      %v91 = vsub.s32 0, %v90
      %v92 = vrot.slane %v87, %v91
      %94 = vmatprep.subr.mxu0 0.0
      %95 = vmatpush1.msra.mxu0 %v71
      %96 = vmatprep.subr.mxu0 0.0
      %97 = vmatpush1.msra.mxu0 %v72
      %98 = vmatprep.subr.mxu0 0.0
      %99 = vmatpush1.msra.mxu0 %v73
      %100 = vmatprep.subr.mxu0 0.0
      %101 = vmatpush1.msra.mxu0 %v74
      %102 = vmatprep.subr.mxu0 0.0
      %103 = vmatpush1.msra.mxu0 %v75
      %104 = vmatprep.subr.mxu0 0.0
      %105 = vmatpush1.msra.mxu0 %v76
      %106 = vmatprep.subr.mxu0 0.0
      %107 = vmatpush1.msra.mxu0 %v77
      %108 = vmatprep.subr.mxu0 0.0
      %109 = vmatpush1.msra.mxu0 %v78
      %110 = vmatprep.subr.mxu0 0.0
      %111 = vmatpush1.msra.mxu0 %v79
      %112 = vmatprep.subr.mxu0 0.0
      %113 = vmatpush1.msra.mxu0 %v80
      %114 = vmatprep.subr.mxu0 0.0
      %115 = vmatpush1.msra.mxu0 %v81
      %116 = vmatprep.subr.mxu0 0.0
      %117 = vmatpush1.msra.mxu0 %v82
      %118 = vmatprep.subr.mxu0 0.0
      %119 = vmatpush1.msra.mxu0 %v83
      %120 = vmatprep.subr.mxu0 0.0
      %121 = vmatpush1.msra.mxu0 %v84
      %122 = vmatprep.subr.mxu0 0.0
      %123 = vmatpush1.msra.mxu0 %v85
      %124 = vmatprep.subr.mxu0 0.0
      %125 = vmatpush1.msra.mxu0 %v86
      %126 = vmatprep.subr.mxu0 0.0
      %127 = vmatpush1.msra.mxu0 0.0
      %128 = vmatprep.subr.mxu0 0.0
      %129 = vmatpush1.msra.mxu0 0.0
      %130 = vmatprep.subr.mxu0 0.0
      %131 = vmatpush1.msra.mxu0 0.0
      %132 = vmatprep.subr.mxu0 0.0
      %133 = vmatpush1.msra.mxu0 0.0
      %134 = vmatprep.subr.mxu0 0.0
      %135 = vmatpush1.msra.mxu0 0.0
      %136 = vmatprep.subr.mxu0 0.0
      %137 = vmatpush1.msra.mxu0 0.0
      %138 = vmatprep.subr.mxu0 0.0
      %139 = vmatpush1.msra.mxu0 0.0
      %140 = vmatprep.subr.mxu0 0.0
      %141 = vmatpush1.msra.mxu0 0.0
      %142 = vmatprep.subr.mxu0 0.0
      %143 = vmatpush1.msra.mxu0 0.0
      %144 = vmatprep.subr.mxu0 0.0
      %145 = vmatpush1.msra.mxu0 0.0
      %146 = vmatprep.subr.mxu0 0.0
      %147 = vmatpush1.msra.mxu0 0.0
      %148 = vmatprep.subr.mxu0 0.0
      %149 = vmatpush1.msra.mxu0 0.0
      %150 = vmatprep.subr.mxu0 0.0
      %151 = vmatpush1.msra.mxu0 0.0
      %152 = vmatprep.subr.mxu0 0.0
      %153 = vmatpush1.msra.mxu0 0.0
      %154 = vmatprep.subr.mxu0 0.0
      %155 = vmatpush1.msra.mxu0 0.0
      %156 = vmatprep.subr.mxu0 0.0
      %157 = vmatpush1.msra.mxu0 0.0
      %158 = vmatprep.mubr.f32.mxu0 0.0
      %159 = vmatmul.mubr.f32.gmra.mrb[0].mxu0 %v69
      %v160 = vpop.f32.mrb[0].mxu0
      %v161 = vadd.f32 %v92, %v160
      %v162 = vpop.f32.mrb[0].mxu0
      %163 = vmatprep.mubr.f32.mxu0 0.0
      %164 = vmatmul.mubr.f32.gmra.mrb[0].mxu0 %v70
      %v165 = vpop.f32.mrb[0].mxu0
      %v166 = vadd.f32 %v92, %v165
      %v167 = vpop.f32.mrb[0].mxu0
      %168 = vdwg.mxu0
      %v169 = vmul.f32 %v161, 0.5
      %v170 = vmul.f32 %v166, 0.5
      %v171 = vmul.f32 %v161, 0.70710677
      %v172 = vmul.f32 %v166, 0.70710677
      %v173 = verf.f32.pop %v171
      %v174 = verf.f32.pop %v172
      %v175 = vadd.f32 %v173, 1.0
      %v176 = vadd.f32 %v174, 1.0
      %v177 = vmul.f32 %v169, %v175
      %v178 = vmul.f32 %v170, %v176
      %179 = vadd.xlane.f32.xlu0 %v177
      %v180 = vpop.xlane.xlu0 %179
      %181 = vadd.xlane.f32.xlu0 %v178
      %v182 = vpop.xlane.xlu0 %181
      %v183 = vrcp.pop 128.0
      %v184 = vmul.f32 %v180, %v183
      %v185 = vmul.f32 %v182, %v183
      %v186 = vmul.f32 %v177, %v177
      %v187 = vmul.f32 %v178, %v178
      %188 = vadd.xlane.f32.xlu0 %v186
      %v189 = vpop.xlane.xlu0 %188
      %190 = vadd.xlane.f32.xlu0 %v187
      %v191 = vpop.xlane.xlu0 %190
      %v192 = vmul.f32 %v189, %v183
      %v193 = vmul.f32 %v191, %v183
      %v194 = vmul.f32 %v184, %v184
      %v195 = vmul.f32 %v185, %v185
      %v196 = vsub.f32 %v192, %v194
      %v197 = vsub.f32 %v193, %v195
      %v198 = vsub.f32 %v177, %v184
      %v199 = vsub.f32 %v178, %v185
      %v200 = vadd.f32 %v196, 1e-12
      %v201 = vadd.f32 %v197, 1e-12
      %v202 = vrsqrt.pop %v200
      %v203 = vrsqrt.pop %v201
      %v204 = vmul.f32 %v198, %v202
      %v205 = vmul.f32 %v199, %v203
      %v206 = vld [vmem:[%s3] sm:$0x1]
      %v208 = vlaneseq
      %v209 = vshrl.u32 %v208, 7
      %v210 = vsub.s32 0, %v209
      %v211 = vrot.slane %v206, %v210
      %v213 = vmul.f32 %v204, %v211
      %v214 = vmul.f32 %v205, %v211
      %v215 = vld [vmem:[%s4] sm:$0x1]
      %v217 = vlaneseq
      %v218 = vshrl.u32 %v217, 7
      %v219 = vsub.s32 0, %v218
      %v220 = vrot.slane %v215, %v219
      %v222 = vadd.f32 %v213, %v220
      %v223 = vadd.f32 %v214, %v220
      %224 = vst [vmem:[#allocation2] sm:$0xff] %v222
      %225 = vst [vmem:[#allocation2 + $0x8] sm:$0xff] %v223
    $region41: #{tpu_custom_call.1} parent=1 // pred_fallthru
      _
    %v226 = vld [vmem:[#allocation2] sm:$0xff]
    %v227 = vld [vmem:[#allocation2 + $0x8] sm:$0xff]
    %v228 = vld [vmem:[#allocation8] sm:$0xff]
    %v229 = vld [vmem:[#allocation8 + $0x8] sm:$0xff]
    %v230 = vld [vmem:[#allocation8 + $0x10] sm:$0xff]
    %v231 = vld [vmem:[#allocation8 + $0x18] sm:$0xff]
    %v232 = vld [vmem:[#allocation8 + $0x20] sm:$0xff]
    %v233 = vld [vmem:[#allocation8 + $0x28] sm:$0xff]
    %v234 = vld [vmem:[#allocation8 + $0x30] sm:$0xff]
    %v235 = vld [vmem:[#allocation8 + $0x38] sm:$0xff]
    %v236 = vld [vmem:[#allocation8 + $0x40] sm:$0xff]
    %v237 = vld [vmem:[#allocation8 + $0x48] sm:$0xff]
    %v238 = vld [vmem:[#allocation8 + $0x50] sm:$0xff]
    %v239 = vld [vmem:[#allocation8 + $0x58] sm:$0xff]
    %v240 = vld [vmem:[#allocation8 + $0x60] sm:$0xff]
    %v241 = vld [vmem:[#allocation8 + $0x68] sm:$0xff]
    %v242 = vld [vmem:[#allocation8 + $0x70] sm:$0xff]
    %v243 = vld [vmem:[#allocation8 + $0x78] sm:$0xff]
    %v244 = vld [vmem:[#allocation8 + $0x80] sm:$0xff]
    %v245 = vld [vmem:[#allocation8 + $0x88] sm:$0xff]
    %v246 = vld [vmem:[#allocation8 + $0x90] sm:$0xff]
    %v247 = vld [vmem:[#allocation8 + $0x98] sm:$0xff]
    %v248 = vld [vmem:[#allocation8 + $0xa0] sm:$0xff]
    %v249 = vld [vmem:[#allocation8 + $0xa8] sm:$0xff]
    %v250 = vld [vmem:[#allocation8 + $0xb0] sm:$0xff]
    %v251 = vld [vmem:[#allocation8 + $0xb8] sm:$0xff]
    %v252 = vld [vmem:[#allocation8 + $0xc0] sm:$0xff]
    %v253 = vld [vmem:[#allocation8 + $0xc8] sm:$0xff]
    %v254 = vld [vmem:[#allocation8 + $0xd0] sm:$0xff]
    %v255 = vld [vmem:[#allocation8 + $0xd8] sm:$0xff]
    %v256 = vld [vmem:[#allocation8 + $0xe0] sm:$0xff]
    %v257 = vld [vmem:[#allocation8 + $0xe8] sm:$0xff]
    %v258 = vld [vmem:[#allocation8 + $0xf0] sm:$0xff]
    %v259 = vld [vmem:[#allocation8 + $0xf8] sm:$0xff]
    %v260 = vld [vmem:[#allocation8 + $0x100] sm:$0xff]
    %v261 = vld [vmem:[#allocation8 + $0x108] sm:$0xff]
    %v262 = vld [vmem:[#allocation8 + $0x110] sm:$0xff]
    %v263 = vld [vmem:[#allocation8 + $0x118] sm:$0xff]
    %v264 = vld [vmem:[#allocation8 + $0x120] sm:$0xff]
    %v265 = vld [vmem:[#allocation8 + $0x128] sm:$0xff]
    %v266 = vld [vmem:[#allocation8 + $0x130] sm:$0xff]
    %v267 = vld [vmem:[#allocation8 + $0x138] sm:$0xff]
    %v268 = vld [vmem:[#allocation8 + $0x140] sm:$0xff]
    %v269 = vld [vmem:[#allocation8 + $0x148] sm:$0xff]
    %v270 = vld [vmem:[#allocation8 + $0x150] sm:$0xff]
    %v271 = vld [vmem:[#allocation8 + $0x158] sm:$0xff]
    %v272 = vld [vmem:[#allocation8 + $0x160] sm:$0xff]
    %v273 = vld [vmem:[#allocation8 + $0x168] sm:$0xff]
    %v274 = vld [vmem:[#allocation8 + $0x170] sm:$0xff]
    %v275 = vld [vmem:[#allocation8 + $0x178] sm:$0xff]
    %v276 = vld [vmem:[#allocation8 + $0x180] sm:$0xff]
    %v277 = vld [vmem:[#allocation8 + $0x188] sm:$0xff]
    %v278 = vld [vmem:[#allocation8 + $0x190] sm:$0xff]
    %v279 = vld [vmem:[#allocation8 + $0x198] sm:$0xff]
    %v280 = vld [vmem:[#allocation8 + $0x1a0] sm:$0xff]
    %v281 = vld [vmem:[#allocation8 + $0x1a8] sm:$0xff]
    %v282 = vld [vmem:[#allocation8 + $0x1b0] sm:$0xff]
    %v283 = vld [vmem:[#allocation8 + $0x1b8] sm:$0xff]
    %v284 = vld [vmem:[#allocation8 + $0x1c0] sm:$0xff]
    %v285 = vld [vmem:[#allocation8 + $0x1c8] sm:$0xff]
    %v286 = vld [vmem:[#allocation8 + $0x1d0] sm:$0xff]
    %v287 = vld [vmem:[#allocation8 + $0x1d8] sm:$0xff]
    %v288 = vld [vmem:[#allocation8 + $0x1e0] sm:$0xff]
    %v289 = vld [vmem:[#allocation8 + $0x1e8] sm:$0xff]
    %v290 = vld [vmem:[#allocation8 + $0x1f0] sm:$0xff]
    %v291 = vld [vmem:[#allocation8 + $0x1f8] sm:$0xff]
    %292 = vmatprep.subr.mxu0 %v229
    %293 = vmatpush1.msra.mxu0 %v228
    %294 = vmatprep.subr.mxu0 %v233
    %295 = vmatpush1.msra.mxu0 %v232
    %296 = vmatprep.subr.mxu0 %v237
    %297 = vmatpush1.msra.mxu0 %v236
    %298 = vmatprep.subr.mxu0 %v241
    %299 = vmatpush1.msra.mxu0 %v240
    %300 = vmatprep.subr.mxu0 %v245
    %301 = vmatpush1.msra.mxu0 %v244
    %302 = vmatprep.subr.mxu0 %v249
    %303 = vmatpush1.msra.mxu0 %v248
    %304 = vmatprep.subr.mxu0 %v253
    %305 = vmatpush1.msra.mxu0 %v252
    %306 = vmatprep.subr.mxu0 %v257
    %307 = vmatpush1.msra.mxu0 %v256
    %308 = vmatprep.subr.mxu0 %v261
    %309 = vmatpush1.msra.mxu0 %v260
    %310 = vmatprep.subr.mxu0 %v265
    %311 = vmatpush1.msra.mxu0 %v264
    %312 = vmatprep.subr.mxu0 %v269
    %313 = vmatpush1.msra.mxu0 %v268
    %314 = vmatprep.subr.mxu0 %v273
    %315 = vmatpush1.msra.mxu0 %v272
    %316 = vmatprep.subr.mxu0 %v277
    %317 = vmatpush1.msra.mxu0 %v276
    %318 = vmatprep.subr.mxu0 %v281
    %319 = vmatpush1.msra.mxu0 %v280
    %320 = vmatprep.subr.mxu0 %v285
    %321 = vmatpush1.msra.mxu0 %v284
    %322 = vmatprep.subr.mxu0 %v289
    %323 = vmatpush1.msra.mxu0 %v288
    %324 = vmatprep.subr.mxu0 0.0
    %325 = vmatpush1.msra.mxu0 0.0
    %326 = vmatprep.subr.mxu0 0.0
    %327 = vmatpush1.msra.mxu0 0.0
    %328 = vmatprep.subr.mxu0 0.0
    %329 = vmatpush1.msra.mxu0 0.0
    %330 = vmatprep.subr.mxu0 0.0
    %331 = vmatpush1.msra.mxu0 0.0
    %332 = vmatprep.subr.mxu0 0.0
    %333 = vmatpush1.msra.mxu0 0.0
    %334 = vmatprep.subr.mxu0 0.0
    %335 = vmatpush1.msra.mxu0 0.0
    %336 = vmatprep.subr.mxu0 0.0
    %337 = vmatpush1.msra.mxu0 0.0
    %338 = vmatprep.subr.mxu0 0.0
    %339 = vmatpush1.msra.mxu0 0.0
    %340 = vmatprep.subr.mxu0 0.0
    %341 = vmatpush1.msra.mxu0 0.0
    %342 = vmatprep.subr.mxu0 0.0
    %343 = vmatpush1.msra.mxu0 0.0
    %344 = vmatprep.subr.mxu0 0.0
    %345 = vmatpush1.msra.mxu0 0.0
    %346 = vmatprep.subr.mxu0 0.0
    %347 = vmatpush1.msra.mxu0 0.0
    %348 = vmatprep.subr.mxu0 0.0
    %349 = vmatpush1.msra.mxu0 0.0
    %350 = vmatprep.subr.mxu0 0.0
    %351 = vmatpush1.msra.mxu0 0.0
    %352 = vmatprep.subr.mxu0 0.0
    %353 = vmatpush1.msra.mxu0 0.0
    %354 = vmatprep.subr.mxu0 0.0
    %355 = vmatpush1.msra.mxu0 0.0
    %356 = vmatprep.mubr.f32.mxu0 0.0
    %357 = vmatmul.mubr.f32.gmra.mrb[0].mxu0 %v226
    %v358 = vpop.f32.mrb[0].mxu0
    %v359 = vadd.f32 0.0, %v358
    %v360 = vpop.f32.mrb[0].mxu0
    %v361 = vadd.f32 0.0, %v360
    %362 = vmatprep.mubr.f32.mxu0 0.0
    %363 = vmatmul.mubr.f32.gmra.mrb[0].mxu0 %v227
    %v364 = vpop.f32.mrb[0].mxu0
    %v365 = vadd.f32 0.0, %v364
    %v366 = vpop.f32.mrb[0].mxu0
    %v367 = vadd.f32 0.0, %v366
    %368 = vdwg.mxu0
    %369 = vmatprep.subr.mxu0 %v231
    %370 = vmatpush1.msra.mxu0 %v230
    %371 = vmatprep.subr.mxu0 %v235
    %372 = vmatpush1.msra.mxu0 %v234
    %373 = vmatprep.subr.mxu0 %v239
    %374 = vmatpush1.msra.mxu0 %v238
    %375 = vmatprep.subr.mxu0 %v243
    %376 = vmatpush1.msra.mxu0 %v242
    %377 = vmatprep.subr.mxu0 %v247
    %378 = vmatpush1.msra.mxu0 %v246
    %379 = vmatprep.subr.mxu0 %v251
    %380 = vmatpush1.msra.mxu0 %v250
    %381 = vmatprep.subr.mxu0 %v255
    %382 = vmatpush1.msra.mxu0 %v254
    %383 = vmatprep.subr.mxu0 %v259
    %384 = vmatpush1.msra.mxu0 %v258
    %385 = vmatprep.subr.mxu0 %v263
    %386 = vmatpush1.msra.mxu0 %v262
    %387 = vmatprep.subr.mxu0 %v267
    %388 = vmatpush1.msra.mxu0 %v266
    %389 = vmatprep.subr.mxu0 %v271
    %390 = vmatpush1.msra.mxu0 %v270
    %391 = vmatprep.subr.mxu0 %v275
    %392 = vmatpush1.msra.mxu0 %v274
    %393 = vmatprep.subr.mxu0 %v279
    %394 = vmatpush1.msra.mxu0 %v278
    %395 = vmatprep.subr.mxu0 %v283
    %396 = vmatpush1.msra.mxu0 %v282
    %397 = vmatprep.subr.mxu0 %v287
    %398 = vmatpush1.msra.mxu0 %v286
    %399 = vmatprep.subr.mxu0 %v291
    %400 = vmatpush1.msra.mxu0 %v290
    %401 = vmatprep.subr.mxu0 0.0
    %402 = vmatpush1.msra.mxu0 0.0
    %403 = vmatprep.subr.mxu0 0.0
    %404 = vmatpush1.msra.mxu0 0.0
    %405 = vmatprep.subr.mxu0 0.0
    %406 = vmatpush1.msra.mxu0 0.0
    %407 = vmatprep.subr.mxu0 0.0
    %408 = vmatpush1.msra.mxu0 0.0
    %409 = vmatprep.subr.mxu0 0.0
    %410 = vmatpush1.msra.mxu0 0.0
    %411 = vmatprep.subr.mxu0 0.0
    %412 = vmatpush1.msra.mxu0 0.0
    %413 = vmatprep.subr.mxu0 0.0
    %414 = vmatpush1.msra.mxu0 0.0
    %415 = vmatprep.subr.mxu0 0.0
    %416 = vmatpush1.msra.mxu0 0.0
    %417 = vmatprep.subr.mxu0 0.0
    %418 = vmatpush1.msra.mxu0 0.0
    %419 = vmatprep.subr.mxu0 0.0
    %420 = vmatpush1.msra.mxu0 0.0
    %421 = vmatprep.subr.mxu0 0.0
    %422 = vmatpush1.msra.mxu0 0.0
    %423 = vmatprep.subr.mxu0 0.0
    %424 = vmatpush1.msra.mxu0 0.0
    %425 = vmatprep.subr.mxu0 0.0
    %426 = vmatpush1.msra.mxu0 0.0
    %427 = vmatprep.subr.mxu0 0.0
    %428 = vmatpush1.msra.mxu0 0.0
    %429 = vmatprep.subr.mxu0 0.0
    %430 = vmatpush1.msra.mxu0 0.0
    %431 = vmatprep.subr.mxu0 0.0
    %432 = vmatpush1.msra.mxu0 0.0
    %433 = vmatprep.mubr.f32.mxu0 0.0
    %434 = vmatmul.mubr.f32.gmra.mrb[0].mxu0 %v226
    %v435 = vpop.f32.mrb[0].mxu0
    %v436 = vadd.f32 0.0, %v435
    %v437 = vpop.f32.mrb[0].mxu0
    %v438 = vadd.f32 0.0, %v437
    %439 = vmatprep.mubr.f32.mxu0 0.0
    %440 = vmatmul.mubr.f32.gmra.mrb[0].mxu0 %v227
    %v441 = vpop.f32.mrb[0].mxu0
    %v442 = vadd.f32 0.0, %v441
    %v443 = vpop.f32.mrb[0].mxu0
    %v444 = vadd.f32 0.0, %v443
    %445 = vdwg.mxu0
    %446 = vst [vmem:[#allocation9] sm:$0xff] %v359
    %447 = vst [vmem:[#allocation9 + $0x8] sm:$0xff] %v361
    %448 = vst [vmem:[#allocation9 + $0x10] sm:$0xff] %v436
    %449 = vst [vmem:[#allocation9 + $0x18] sm:$0xff] %v438
    %450 = vst [vmem:[#allocation9 + $0x20] sm:$0xff] %v365
    %451 = vst [vmem:[#allocation9 + $0x28] sm:$0xff] %v367
    %452 = vst [vmem:[#allocation9 + $0x30] sm:$0xff] %v442
    %453 = vst [vmem:[#allocation9 + $0x38] sm:$0xff] %v444
    // Predicated region
    $region42: #{tpu_custom_call.1} parent=1 // pred_check
      _
    $region43: #{tpu_custom_call.1} parent=1 // pred_check_branch
      %455 = sbr.rel (0) target = $region45
    $region44: #{tpu_custom_call.1} parent=1 // pred_region
      %s457 = ssub.s32 1024, 1024
      %458 = vsyncadd [#allocation5], %s457
      %s459 = sshll.u32 [#allocation9], 4
      %s460 = int_to_ptr.vmem [resolvable:$true] %s459
      %465 = dma.vmem_to_hbm [thread:$0]  %s460, 1024, %s6, [#allocation5], 512, 512, 32
    $region45: #{tpu_custom_call.1} parent=1 // pred_fallthru
      _
    // Predicated region
    $region46: #{tpu_custom_call.1} parent=1 // pred_check
      _
    $region47: #{tpu_custom_call.1} parent=1 // pred_check_branch
      %467 = sbr.rel (0) target = $region49
    $region48: #{tpu_custom_call.1} parent=1 // pred_region
      %468 = dma.done [#allocation5], 1024
    $region49: #{tpu_custom_call.1} parent=1 // pred_fallthru
      _
    %469 = vsyncpa [#allocation4], 1
    %470 = vsyncpa [#allocation7], 1
    %471 = vsyncpa [#allocation5], 1

// kernel: tpu_custom_call.1
$region0: #{tpu_custom_call.1}
  #allocation0 [shape = 'u32[]', space=smem, size = 0x4, offset = 0x4, fixed_abs, tag = 'smem constant byte address 0x4 - core index']
  #allocation1 [shape = 'u32[144,128]{1,0:T(1,128)}', space=vmem, size = 0x12000, scoped, tag = 'internal scratch']
  #allocation2 [shape = 'f32[16,128]{1,0:T(8,128)}', space=vmem, size = 0x2000, scoped, tag = 'scratch operand']
  %s0 = inlined_call_operand.hbm [shape: f32[16,128], index: 0, kind: input, shape index: {}]
  %s1 = inlined_call_operand.hbm [shape: f32[128,128], index: 1, kind: input, shape index: {}]
  %s2 = inlined_call_operand.vmem [shape: f32[1,128], index: 2, kind: input, shape index: {}]
  %s3 = inlined_call_operand.vmem [shape: f32[1,128], index: 3, kind: input, shape index: {}]
  %s4 = inlined_call_operand.vmem [shape: f32[1,128], index: 4, kind: input, shape index: {}]
  %s5 = inlined_call_operand.hbm [shape: f32[128,512], index: 5, kind: input, shape index: {}]
  %s6 = inlined_call_operand.hbm [shape: f32[16,512], index: 6, kind: output, shape index: {}]
  %s7 = sld [smem:[#allocation0]]
  $region50: #{tpu_custom_call.1} parent=0
    _
  %s9 = ssub.s32 1, %s7
  %s10 = scalar_select 0, %s9, %s7
  $region1: #{tpu_custom_call.1} parent=0
    #allocation3 [shape = 'u8[8192]{0}', space=vmem, size = 0x2000, scoped, tag = 'input window, operand 0, single buffered']
    #allocation4 [shape = 's32[1]{0}', space=sflag, size = 0x4, scoped, tag = 'scoped memory for tpu_custom_call.1']
    #allocation5 [shape = 's32[1]{0}', space=sflag, size = 0x4, scoped, tag = 'scoped memory for tpu_custom_call.1']
    #allocation6 [shape = 'u8[65536]{0}', space=vmem, size = 0x10000, scoped, tag = 'input window, operand 1, single buffered']
    #allocation7 [shape = 's32[1]{0}', space=sflag, size = 0x4, scoped, tag = 'scoped memory for tpu_custom_call.1']
    #allocation8 [shape = 'u8[262144]{0}', space=vmem, size = 0x40000, scoped, tag = 'input window, operand 5, single buffered']
    #allocation9 [shape = 'u8[32768]{0}', space=vmem, size = 0x8000, scoped, tag = 'output window, operand 0, single buffered']
    %11 = vsyncpa [#allocation4], 0
    %12 = vsyncpa [#allocation7], 0
    %13 = vsyncpa [#allocation5], 0
    // Predicated region
    $region2: #{tpu_custom_call.1} parent=1 // pred_check
      _
    $region3: #{tpu_custom_call.1} parent=1 // pred_check_branch
      %15 = sbr.rel (0) target = $region5
    $region4: #{tpu_custom_call.1} parent=1 // pred_region
      %s17 = ssub.s32 256, 256
      %18 = vsyncadd [#allocation4], %s17
      %s19 = sshll.u32 [#allocation3], 4
      %s20 = int_to_ptr.vmem [resolvable:$true] %s19
      %25 = dma.hbm_to_vmem [thread:$0]  %s0, 256, %s20, [#allocation4], 128, 128, 8
    $region5: #{tpu_custom_call.1} parent=1 // pred_fallthru
      _
    // Predicated region
    $region6: #{tpu_custom_call.1} parent=1 // pred_check
      _
    $region7: #{tpu_custom_call.1} parent=1 // pred_check_branch
      %27 = sbr.rel (0) target = $region9
    $region8: #{tpu_custom_call.1} parent=1 // pred_region
      %s29 = ssub.s32 2048, 2048
      %30 = vsyncadd [#allocation7], %s29
      %s31 = sshll.u32 [#allocation6], 4
      %s32 = int_to_ptr.vmem [resolvable:$true] %s31
      %37 = dma.hbm_to_vmem [thread:$0]  %s1, 2048, %s32, [#allocation7], 128, 128, 8
    $region9: #{tpu_custom_call.1} parent=1 // pred_fallthru
      _
    // Predicated region
    $region10: #{tpu_custom_call.1} parent=1 // pred_check
      _
    $region11: #{tpu_custom_call.1} parent=1 // pred_check_branch
      %39 = sbr.rel (0) target = $region13
    $region12: #{tpu_custom_call.1} parent=1 // pred_region
      _
    $region13: #{tpu_custom_call.1} parent=1 // pred_fallthru
      _
    // Predicated region
    $region14: #{tpu_custom_call.1} parent=1 // pred_check
      _
    $region15: #{tpu_custom_call.1} parent=1 // pred_check_branch
      %41 = sbr.rel (0) target = $region17
    $region16: #{tpu_custom_call.1} parent=1 // pred_region
      _
    $region17: #{tpu_custom_call.1} parent=1 // pred_fallthru
      _
    // Predicated region
    $region18: #{tpu_custom_call.1} parent=1 // pred_check
      _
    $region19: #{tpu_custom_call.1} parent=1 // pred_check_branch
      %43 = sbr.rel (0) target = $region21
    $region20: #{tpu_custom_call.1} parent=1 // pred_region
      _
    $region21: #{tpu_custom_call.1} parent=1 // pred_fallthru
      _
    // Predicated region
    $region22: #{tpu_custom_call.1} parent=1 // pred_check
      _
    $region23: #{tpu_custom_call.1} parent=1 // pred_check_branch
      %45 = sbr.rel (0) target = $region25
    $region24: #{tpu_custom_call.1} parent=1 // pred_region
      %s47 = ssub.s32 8192, 8192
      %48 = vsyncadd [#allocation7], %s47
      %s49 = sshll.u32 [#allocation8], 4
      %s50 = int_to_ptr.vmem [resolvable:$true] %s49
      %55 = dma.hbm_to_vmem [thread:$0]  %s5, 8192, %s50, [#allocation7], 512, 512, 32
    $region25: #{tpu_custom_call.1} parent=1 // pred_fallthru
      _
    // Predicated region
    $region26: #{tpu_custom_call.1} parent=1 // pred_check
      _
    $region27: #{tpu_custom_call.1} parent=1 // pred_check_branch
      %57 = sbr.rel (0) target = $region29
    $region28: #{tpu_custom_call.1} parent=1 // pred_region
      %58 = dma.done [#allocation4], 256
    $region29: #{tpu_custom_call.1} parent=1 // pred_fallthru
      _
    // Predicated region
    $region30: #{tpu_custom_call.1} parent=1 // pred_check
      _
    $region31: #{tpu_custom_call.1} parent=1 // pred_check_branch
      %60 = sbr.rel (0) target = $region33
    $region32: #{tpu_custom_call.1} parent=1 // pred_region
      %61 = dma.done [#allocation7], 2048
    $region33: #{tpu_custom_call.1} parent=1 // pred_fallthru
      _
    // Predicated region
    $region34: #{tpu_custom_call.1} parent=1 // pred_check
      _
    $region35: #{tpu_custom_call.1} parent=1 // pred_check_branch
      %63 = sbr.rel (0) target = $region37
    $region36: #{tpu_custom_call.1} parent=1 // pred_region
      %64 = dma.done [#allocation7], 8192
    $region37: #{tpu_custom_call.1} parent=1 // pred_fallthru
      _
    %p65 = scmp.eq.s32.totalorder 0, 0
    // Predicated region
    $region38: #{tpu_custom_call.1} parent=1 // pred_check
      %p66 = pneg %p65
    $region39: #{tpu_custom_call.1} parent=1 // pred_check_branch
      %68 = sbr.rel (%p66) target = $region41
    $region40: #{tpu_custom_call.1} parent=1 // pred_region
      %v69 = vld [vmem:[#allocation3] sm:$0xff]
      %v70 = vld [vmem:[#allocation3 + $0x8] sm:$0xff]
      %v71 = vld [vmem:[#allocation6] sm:$0xff]
      %v72 = vld [vmem:[#allocation6 + $0x8] sm:$0xff]
      %v73 = vld [vmem:[#allocation6 + $0x10] sm:$0xff]
      %v74 = vld [vmem:[#allocation6 + $0x18] sm:$0xff]
      %v75 = vld [vmem:[#allocation6 + $0x20] sm:$0xff]
      %v76 = vld [vmem:[#allocation6 + $0x28] sm:$0xff]
      %v77 = vld [vmem:[#allocation6 + $0x30] sm:$0xff]
      %v78 = vld [vmem:[#allocation6 + $0x38] sm:$0xff]
      %v79 = vld [vmem:[#allocation6 + $0x40] sm:$0xff]
      %v80 = vld [vmem:[#allocation6 + $0x48] sm:$0xff]
      %v81 = vld [vmem:[#allocation6 + $0x50] sm:$0xff]
      %v82 = vld [vmem:[#allocation6 + $0x58] sm:$0xff]
      %v83 = vld [vmem:[#allocation6 + $0x60] sm:$0xff]
      %v84 = vld [vmem:[#allocation6 + $0x68] sm:$0xff]
      %v85 = vld [vmem:[#allocation6 + $0x70] sm:$0xff]
      %v86 = vld [vmem:[#allocation6 + $0x78] sm:$0xff]
      %v87 = vld [vmem:[%s2] sm:$0x1]
      %v89 = vlaneseq
      %v90 = vshrl.u32 %v89, 7
      %v91 = vsub.s32 0, %v90
      %v92 = vrot.slane %v87, %v91
      %94 = vmatprep.subr.mxu0 0.0
      %95 = vmatpush1.msra.mxu0 %v71
      %96 = vmatprep.subr.mxu0 0.0
      %97 = vmatpush1.msra.mxu0 %v72
      %98 = vmatprep.subr.mxu0 0.0
      %99 = vmatpush1.msra.mxu0 %v73
      %100 = vmatprep.subr.mxu0 0.0
      %101 = vmatpush1.msra.mxu0 %v74
      %102 = vmatprep.subr.mxu0 0.0
      %103 = vmatpush1.msra.mxu0 %v75
      %104 = vmatprep.subr.mxu0 0.0
      %105 = vmatpush1.msra.mxu0 %v76
      %106 = vmatprep.subr.mxu0 0.0
      %107 = vmatpush1.msra.mxu0 %v77
      %108 = vmatprep.subr.mxu0 0.0
      %109 = vmatpush1.msra.mxu0 %v78
      %110 = vmatprep.subr.mxu0 0.0
      %111 = vmatpush1.msra.mxu0 %v79
      %112 = vmatprep.subr.mxu0 0.0
      %113 = vmatpush1.msra.mxu0 %v80
      %114 = vmatprep.subr.mxu0 0.0
      %115 = vmatpush1.msra.mxu0 %v81
      %116 = vmatprep.subr.mxu0 0.0
      %117 = vmatpush1.msra.mxu0 %v82
      %118 = vmatprep.subr.mxu0 0.0
      %119 = vmatpush1.msra.mxu0 %v83
      %120 = vmatprep.subr.mxu0 0.0
      %121 = vmatpush1.msra.mxu0 %v84
      %122 = vmatprep.subr.mxu0 0.0
      %123 = vmatpush1.msra.mxu0 %v85
      %124 = vmatprep.subr.mxu0 0.0
      %125 = vmatpush1.msra.mxu0 %v86
      %126 = vmatprep.subr.mxu0 0.0
      %127 = vmatpush1.msra.mxu0 0.0
      %128 = vmatprep.subr.mxu0 0.0
      %129 = vmatpush1.msra.mxu0 0.0
      %130 = vmatprep.subr.mxu0 0.0
      %131 = vmatpush1.msra.mxu0 0.0
      %132 = vmatprep.subr.mxu0 0.0
      %133 = vmatpush1.msra.mxu0 0.0
      %134 = vmatprep.subr.mxu0 0.0
      %135 = vmatpush1.msra.mxu0 0.0
      %136 = vmatprep.subr.mxu0 0.0
      %137 = vmatpush1.msra.mxu0 0.0
      %138 = vmatprep.subr.mxu0 0.0
      %139 = vmatpush1.msra.mxu0 0.0
      %140 = vmatprep.subr.mxu0 0.0
      %141 = vmatpush1.msra.mxu0 0.0
      %142 = vmatprep.subr.mxu0 0.0
      %143 = vmatpush1.msra.mxu0 0.0
      %144 = vmatprep.subr.mxu0 0.0
      %145 = vmatpush1.msra.mxu0 0.0
      %146 = vmatprep.subr.mxu0 0.0
      %147 = vmatpush1.msra.mxu0 0.0
      %148 = vmatprep.subr.mxu0 0.0
      %149 = vmatpush1.msra.mxu0 0.0
      %150 = vmatprep.subr.mxu0 0.0
      %151 = vmatpush1.msra.mxu0 0.0
      %152 = vmatprep.subr.mxu0 0.0
      %153 = vmatpush1.msra.mxu0 0.0
      %154 = vmatprep.subr.mxu0 0.0
      %155 = vmatpush1.msra.mxu0 0.0
      %156 = vmatprep.subr.mxu0 0.0
      %157 = vmatpush1.msra.mxu0 0.0
      %158 = vmatprep.mubr.f32.mxu0 0.0
      %159 = vmatmul.mubr.f32.gmra.mrb[0].mxu0 %v69
      %v160 = vpop.f32.mrb[0].mxu0
      %v161 = vadd.f32 %v92, %v160
      %v162 = vpop.f32.mrb[0].mxu0
      %163 = vmatprep.mubr.f32.mxu0 0.0
      %164 = vmatmul.mubr.f32.gmra.mrb[0].mxu0 %v70
      %v165 = vpop.f32.mrb[0].mxu0
      %v166 = vadd.f32 %v92, %v165
      %v167 = vpop.f32.mrb[0].mxu0
      %168 = vdwg.mxu0
      %v169 = vmul.f32 %v161, 0.5
      %v170 = vmul.f32 %v166, 0.5
      %v171 = vmul.f32 %v161, 0.70710677
      %v172 = vmul.f32 %v166, 0.70710677
      %v173 = verf.f32.pop %v171
      %v174 = verf.f32.pop %v172
      %v175 = vadd.f32 %v173, 1.0
      %v176 = vadd.f32 %v174, 1.0
      %v177 = vmul.f32 %v169, %v175
      %v178 = vmul.f32 %v170, %v176
      %179 = vadd.xlane.f32.xlu0 %v177
      %v180 = vpop.xlane.xlu0 %179
      %181 = vadd.xlane.f32.xlu0 %v178
      %v182 = vpop.xlane.xlu0 %181
      %v183 = vrcp.pop 128.0
      %v184 = vmul.f32 %v180, %v183
      %v185 = vmul.f32 %v182, %v183
      %v186 = vmul.f32 %v177, %v177
      %v187 = vmul.f32 %v178, %v178
      %188 = vadd.xlane.f32.xlu0 %v186
      %v189 = vpop.xlane.xlu0 %188
      %190 = vadd.xlane.f32.xlu0 %v187
      %v191 = vpop.xlane.xlu0 %190
      %v192 = vmul.f32 %v189, %v183
      %v193 = vmul.f32 %v191, %v183
      %v194 = vmul.f32 %v184, %v184
      %v195 = vmul.f32 %v185, %v185
      %v196 = vsub.f32 %v192, %v194
      %v197 = vsub.f32 %v193, %v195
      %v198 = vsub.f32 %v177, %v184
      %v199 = vsub.f32 %v178, %v185
      %v200 = vadd.f32 %v196, 1e-12
      %v201 = vadd.f32 %v197, 1e-12
      %v202 = vrsqrt.pop %v200
      %v203 = vrsqrt.pop %v201
      %v204 = vmul.f32 %v198, %v202
      %v205 = vmul.f32 %v199, %v203
      %v206 = vld [vmem:[%s3] sm:$0x1]
      %v208 = vlaneseq
      %v209 = vshrl.u32 %v208, 7
      %v210 = vsub.s32 0, %v209
      %v211 = vrot.slane %v206, %v210
      %v213 = vmul.f32 %v204, %v211
      %v214 = vmul.f32 %v205, %v211
      %v215 = vld [vmem:[%s4] sm:$0x1]
      %v217 = vlaneseq
      %v218 = vshrl.u32 %v217, 7
      %v219 = vsub.s32 0, %v218
      %v220 = vrot.slane %v215, %v219
      %v222 = vadd.f32 %v213, %v220
      %v223 = vadd.f32 %v214, %v220
      %224 = vst [vmem:[#allocation2] sm:$0xff] %v222
      %225 = vst [vmem:[#allocation2 + $0x8] sm:$0xff] %v223
    $region41: #{tpu_custom_call.1} parent=1 // pred_fallthru
      _
    %v226 = vld [vmem:[#allocation2] sm:$0xff]
    %v227 = vld [vmem:[#allocation2 + $0x8] sm:$0xff]
    %v228 = vld [vmem:[#allocation8] sm:$0xff]
    %v229 = vld [vmem:[#allocation8 + $0x8] sm:$0xff]
    %v230 = vld [vmem:[#allocation8 + $0x10] sm:$0xff]
    %v231 = vld [vmem:[#allocation8 + $0x18] sm:$0xff]
    %v232 = vld [vmem:[#allocation8 + $0x20] sm:$0xff]
    %v233 = vld [vmem:[#allocation8 + $0x28] sm:$0xff]
    %v234 = vld [vmem:[#allocation8 + $0x30] sm:$0xff]
    %v235 = vld [vmem:[#allocation8 + $0x38] sm:$0xff]
    %v236 = vld [vmem:[#allocation8 + $0x40] sm:$0xff]
    %v237 = vld [vmem:[#allocation8 + $0x48] sm:$0xff]
    %v238 = vld [vmem:[#allocation8 + $0x50] sm:$0xff]
    %v239 = vld [vmem:[#allocation8 + $0x58] sm:$0xff]
    %v240 = vld [vmem:[#allocation8 + $0x60] sm:$0xff]
    %v241 = vld [vmem:[#allocation8 + $0x68] sm:$0xff]
    %v242 = vld [vmem:[#allocation8 + $0x70] sm:$0xff]
    %v243 = vld [vmem:[#allocation8 + $0x78] sm:$0xff]
    %v244 = vld [vmem:[#allocation8 + $0x80] sm:$0xff]
    %v245 = vld [vmem:[#allocation8 + $0x88] sm:$0xff]
    %v246 = vld [vmem:[#allocation8 + $0x90] sm:$0xff]
    %v247 = vld [vmem:[#allocation8 + $0x98] sm:$0xff]
    %v248 = vld [vmem:[#allocation8 + $0xa0] sm:$0xff]
    %v249 = vld [vmem:[#allocation8 + $0xa8] sm:$0xff]
    %v250 = vld [vmem:[#allocation8 + $0xb0] sm:$0xff]
    %v251 = vld [vmem:[#allocation8 + $0xb8] sm:$0xff]
    %v252 = vld [vmem:[#allocation8 + $0xc0] sm:$0xff]
    %v253 = vld [vmem:[#allocation8 + $0xc8] sm:$0xff]
    %v254 = vld [vmem:[#allocation8 + $0xd0] sm:$0xff]
    %v255 = vld [vmem:[#allocation8 + $0xd8] sm:$0xff]
    %v256 = vld [vmem:[#allocation8 + $0xe0] sm:$0xff]
    %v257 = vld [vmem:[#allocation8 + $0xe8] sm:$0xff]
    %v258 = vld [vmem:[#allocation8 + $0xf0] sm:$0xff]
    %v259 = vld [vmem:[#allocation8 + $0xf8] sm:$0xff]
    %v260 = vld [vmem:[#allocation8 + $0x100] sm:$0xff]
    %v261 = vld [vmem:[#allocation8 + $0x108] sm:$0xff]
    %v262 = vld [vmem:[#allocation8 + $0x110] sm:$0xff]
    %v263 = vld [vmem:[#allocation8 + $0x118] sm:$0xff]
    %v264 = vld [vmem:[#allocation8 + $0x120] sm:$0xff]
    %v265 = vld [vmem:[#allocation8 + $0x128] sm:$0xff]
    %v266 = vld [vmem:[#allocation8 + $0x130] sm:$0xff]
    %v267 = vld [vmem:[#allocation8 + $0x138] sm:$0xff]
    %v268 = vld [vmem:[#allocation8 + $0x140] sm:$0xff]
    %v269 = vld [vmem:[#allocation8 + $0x148] sm:$0xff]
    %v270 = vld [vmem:[#allocation8 + $0x150] sm:$0xff]
    %v271 = vld [vmem:[#allocation8 + $0x158] sm:$0xff]
    %v272 = vld [vmem:[#allocation8 + $0x160] sm:$0xff]
    %v273 = vld [vmem:[#allocation8 + $0x168] sm:$0xff]
    %v274 = vld [vmem:[#allocation8 + $0x170] sm:$0xff]
    %v275 = vld [vmem:[#allocation8 + $0x178] sm:$0xff]
    %v276 = vld [vmem:[#allocation8 + $0x180] sm:$0xff]
    %v277 = vld [vmem:[#allocation8 + $0x188] sm:$0xff]
    %v278 = vld [vmem:[#allocation8 + $0x190] sm:$0xff]
    %v279 = vld [vmem:[#allocation8 + $0x198] sm:$0xff]
    %v280 = vld [vmem:[#allocation8 + $0x1a0] sm:$0xff]
    %v281 = vld [vmem:[#allocation8 + $0x1a8] sm:$0xff]
    %v282 = vld [vmem:[#allocation8 + $0x1b0] sm:$0xff]
    %v283 = vld [vmem:[#allocation8 + $0x1b8] sm:$0xff]
    %v284 = vld [vmem:[#allocation8 + $0x1c0] sm:$0xff]
    %v285 = vld [vmem:[#allocation8 + $0x1c8] sm:$0xff]
    %v286 = vld [vmem:[#allocation8 + $0x1d0] sm:$0xff]
    %v287 = vld [vmem:[#allocation8 + $0x1d8] sm:$0xff]
    %v288 = vld [vmem:[#allocation8 + $0x1e0] sm:$0xff]
    %v289 = vld [vmem:[#allocation8 + $0x1e8] sm:$0xff]
    %v290 = vld [vmem:[#allocation8 + $0x1f0] sm:$0xff]
    %v291 = vld [vmem:[#allocation8 + $0x1f8] sm:$0xff]
    %292 = vmatprep.subr.mxu0 %v229
    %293 = vmatpush1.msra.mxu0 %v228
    %294 = vmatprep.subr.mxu0 %v233
    %295 = vmatpush1.msra.mxu0 %v232
    %296 = vmatprep.subr.mxu0 %v237
    %297 = vmatpush1.msra.mxu0 %v236
    %298 = vmatprep.subr.mxu0 %v241
    %299 = vmatpush1.msra.mxu0 %v240
    %300 = vmatprep.subr.mxu0 %v245
    %301 = vmatpush1.msra.mxu0 %v244
    %302 = vmatprep.subr.mxu0 %v249
    %303 = vmatpush1.msra.mxu0 %v248
    %304 = vmatprep.subr.mxu0 %v253
    %305 = vmatpush1.msra.mxu0 %v252
    %306 = vmatprep.subr.mxu0 %v257
    %307 = vmatpush1.msra.mxu0 %v256
    %308 = vmatprep.subr.mxu0 %v261
    %309 = vmatpush1.msra.mxu0 %v260
    %310 = vmatprep.subr.mxu0 %v265
    %311 = vmatpush1.msra.mxu0 %v264
    %312 = vmatprep.subr.mxu0 %v269
    %313 = vmatpush1.msra.mxu0 %v268
    %314 = vmatprep.subr.mxu0 %v273
    %315 = vmatpush1.msra.mxu0 %v272
    %316 = vmatprep.subr.mxu0 %v277
    %317 = vmatpush1.msra.mxu0 %v276
    %318 = vmatprep.subr.mxu0 %v281
    %319 = vmatpush1.msra.mxu0 %v280
    %320 = vmatprep.subr.mxu0 %v285
    %321 = vmatpush1.msra.mxu0 %v284
    %322 = vmatprep.subr.mxu0 %v289
    %323 = vmatpush1.msra.mxu0 %v288
    %324 = vmatprep.subr.mxu0 0.0
    %325 = vmatpush1.msra.mxu0 0.0
    %326 = vmatprep.subr.mxu0 0.0
    %327 = vmatpush1.msra.mxu0 0.0
    %328 = vmatprep.subr.mxu0 0.0
    %329 = vmatpush1.msra.mxu0 0.0
    %330 = vmatprep.subr.mxu0 0.0
    %331 = vmatpush1.msra.mxu0 0.0
    %332 = vmatprep.subr.mxu0 0.0
    %333 = vmatpush1.msra.mxu0 0.0
    %334 = vmatprep.subr.mxu0 0.0
    %335 = vmatpush1.msra.mxu0 0.0
    %336 = vmatprep.subr.mxu0 0.0
    %337 = vmatpush1.msra.mxu0 0.0
    %338 = vmatprep.subr.mxu0 0.0
    %339 = vmatpush1.msra.mxu0 0.0
    %340 = vmatprep.subr.mxu0 0.0
    %341 = vmatpush1.msra.mxu0 0.0
    %342 = vmatprep.subr.mxu0 0.0
    %343 = vmatpush1.msra.mxu0 0.0
    %344 = vmatprep.subr.mxu0 0.0
    %345 = vmatpush1.msra.mxu0 0.0
    %346 = vmatprep.subr.mxu0 0.0
    %347 = vmatpush1.msra.mxu0 0.0
    %348 = vmatprep.subr.mxu0 0.0
    %349 = vmatpush1.msra.mxu0 0.0
    %350 = vmatprep.subr.mxu0 0.0
    %351 = vmatpush1.msra.mxu0 0.0
    %352 = vmatprep.subr.mxu0 0.0
    %353 = vmatpush1.msra.mxu0 0.0
    %354 = vmatprep.subr.mxu0 0.0
    %355 = vmatpush1.msra.mxu0 0.0
    %356 = vmatprep.mubr.f32.mxu0 0.0
    %357 = vmatmul.mubr.f32.gmra.mrb[0].mxu0 %v226
    %v358 = vpop.f32.mrb[0].mxu0
    %v359 = vadd.f32 0.0, %v358
    %v360 = vpop.f32.mrb[0].mxu0
    %v361 = vadd.f32 0.0, %v360
    %362 = vmatprep.mubr.f32.mxu0 0.0
    %363 = vmatmul.mubr.f32.gmra.mrb[0].mxu0 %v227
    %v364 = vpop.f32.mrb[0].mxu0
    %v365 = vadd.f32 0.0, %v364
    %v366 = vpop.f32.mrb[0].mxu0
    %v367 = vadd.f32 0.0, %v366
    %368 = vdwg.mxu0
    %369 = vmatprep.subr.mxu0 %v231
    %370 = vmatpush1.msra.mxu0 %v230
    %371 = vmatprep.subr.mxu0 %v235
    %372 = vmatpush1.msra.mxu0 %v234
    %373 = vmatprep.subr.mxu0 %v239
    %374 = vmatpush1.msra.mxu0 %v238
    %375 = vmatprep.subr.mxu0 %v243
    %376 = vmatpush1.msra.mxu0 %v242
    %377 = vmatprep.subr.mxu0 %v247
    %378 = vmatpush1.msra.mxu0 %v246
    %379 = vmatprep.subr.mxu0 %v251
    %380 = vmatpush1.msra.mxu0 %v250
    %381 = vmatprep.subr.mxu0 %v255
    %382 = vmatpush1.msra.mxu0 %v254
    %383 = vmatprep.subr.mxu0 %v259
    %384 = vmatpush1.msra.mxu0 %v258
    %385 = vmatprep.subr.mxu0 %v263
    %386 = vmatpush1.msra.mxu0 %v262
    %387 = vmatprep.subr.mxu0 %v267
    %388 = vmatpush1.msra.mxu0 %v266
    %389 = vmatprep.subr.mxu0 %v271
    %390 = vmatpush1.msra.mxu0 %v270
    %391 = vmatprep.subr.mxu0 %v275
    %392 = vmatpush1.msra.mxu0 %v274
    %393 = vmatprep.subr.mxu0 %v279
    %394 = vmatpush1.msra.mxu0 %v278
    %395 = vmatprep.subr.mxu0 %v283
    %396 = vmatpush1.msra.mxu0 %v282
    %397 = vmatprep.subr.mxu0 %v287
    %398 = vmatpush1.msra.mxu0 %v286
    %399 = vmatprep.subr.mxu0 %v291
    %400 = vmatpush1.msra.mxu0 %v290
    %401 = vmatprep.subr.mxu0 0.0
    %402 = vmatpush1.msra.mxu0 0.0
    %403 = vmatprep.subr.mxu0 0.0
    %404 = vmatpush1.msra.mxu0 0.0
    %405 = vmatprep.subr.mxu0 0.0
    %406 = vmatpush1.msra.mxu0 0.0
    %407 = vmatprep.subr.mxu0 0.0
    %408 = vmatpush1.msra.mxu0 0.0
    %409 = vmatprep.subr.mxu0 0.0
    %410 = vmatpush1.msra.mxu0 0.0
    %411 = vmatprep.subr.mxu0 0.0
    %412 = vmatpush1.msra.mxu0 0.0
    %413 = vmatprep.subr.mxu0 0.0
    %414 = vmatpush1.msra.mxu0 0.0
    %415 = vmatprep.subr.mxu0 0.0
    %416 = vmatpush1.msra.mxu0 0.0
    %417 = vmatprep.subr.mxu0 0.0
    %418 = vmatpush1.msra.mxu0 0.0
    %419 = vmatprep.subr.mxu0 0.0
    %420 = vmatpush1.msra.mxu0 0.0
    %421 = vmatprep.subr.mxu0 0.0
    %422 = vmatpush1.msra.mxu0 0.0
    %423 = vmatprep.subr.mxu0 0.0
    %424 = vmatpush1.msra.mxu0 0.0
    %425 = vmatprep.subr.mxu0 0.0
    %426 = vmatpush1.msra.mxu0 0.0
    %427 = vmatprep.subr.mxu0 0.0
    %428 = vmatpush1.msra.mxu0 0.0
    %429 = vmatprep.subr.mxu0 0.0
    %430 = vmatpush1.msra.mxu0 0.0
    %431 = vmatprep.subr.mxu0 0.0
    %432 = vmatpush1.msra.mxu0 0.0
    %433 = vmatprep.mubr.f32.mxu0 0.0
    %434 = vmatmul.mubr.f32.gmra.mrb[0].mxu0 %v226
    %v435 = vpop.f32.mrb[0].mxu0
    %v436 = vadd.f32 0.0, %v435
    %v437 = vpop.f32.mrb[0].mxu0
    %v438 = vadd.f32 0.0, %v437
    %439 = vmatprep.mubr.f32.mxu0 0.0
    %440 = vmatmul.mubr.f32.gmra.mrb[0].mxu0 %v227
    %v441 = vpop.f32.mrb[0].mxu0
    %v442 = vadd.f32 0.0, %v441
    %v443 = vpop.f32.mrb[0].mxu0
    %v444 = vadd.f32 0.0, %v443
    %445 = vdwg.mxu0
    %446 = vst [vmem:[#allocation9] sm:$0xff] %v359
    %447 = vst [vmem:[#allocation9 + $0x8] sm:$0xff] %v361
    %448 = vst [vmem:[#allocation9 + $0x10] sm:$0xff] %v436
    %449 = vst [vmem:[#allocation9 + $0x18] sm:$0xff] %v438
    %450 = vst [vmem:[#allocation9 + $0x20] sm:$0xff] %v365
    %451 = vst [vmem:[#allocation9 + $0x28] sm:$0xff] %v367
    %452 = vst [vmem:[#allocation9 + $0x30] sm:$0xff] %v442
    %453 = vst [vmem:[#allocation9 + $0x38] sm:$0xff] %v444
    // Predicated region
    $region42: #{tpu_custom_call.1} parent=1 // pred_check
      _
    $region43: #{tpu_custom_call.1} parent=1 // pred_check_branch
      %455 = sbr.rel (0) target = $region45
    $region44: #{tpu_custom_call.1} parent=1 // pred_region
      %s457 = ssub.s32 1024, 1024
      %458 = vsyncadd [#allocation5], %s457
      %s459 = sshll.u32 [#allocation9], 4
      %s460 = int_to_ptr.vmem [resolvable:$true] %s459
      %465 = dma.vmem_to_hbm [thread:$0]  %s460, 1024, %s6, [#allocation5], 512, 512, 32
    $region45: #{tpu_custom_call.1} parent=1 // pred_fallthru
      _
    // Predicated region
    $region46: #{tpu_custom_call.1} parent=1 // pred_check
      _
    $region47: #{tpu_custom_call.1} parent=1 // pred_check_branch
      %467 = sbr.rel (0) target = $region49
    $region48: #{tpu_custom_call.1} parent=1 // pred_region
      %468 = dma.done [#allocation5], 1024
    $region49: #{tpu_custom_call.1} parent=1 // pred_fallthru
      _
    %469 = vsyncpa [#allocation4], 1
    %470 = vsyncpa [#allocation7], 1
    %471 = vsyncpa [#allocation5], 1

</llo_original>
